<compile_context>
chip_gen: v7x
topology: tpu7x:2x2x1
jax: 0.10.0
libtpu: 0.0.40
codegen_flags: <defaults>
</compile_context>

<pallas_src>
import math
import functools

import jax
import jax.numpy as jnp
from jax import lax
from jax.experimental import pallas as pl
from jax.experimental.pallas import tpu as pltpu


# ----------------------------------------------------------------------------
# helpers
# ----------------------------------------------------------------------------
def _pick_tile(dim, target, align):
    """Largest multiple of `align` that divides `dim` and is <= `target`;
    falls back to the full dimension (always a valid Pallas block).
    NOTE: the full-dim fallback can blow VMEM for awkward (prime-ish) dims."""
    if dim <= target:
        return dim
    t = (target // align) * align
    while t >= align:
        if dim % t == 0:
            return t
        t -= align
    return dim


def _sublane_align(dtype):
    """Second-to-last block dim multiple required by the dtype packing."""
    return {4: 8, 2: 16, 1: 32}.get(jnp.dtype(dtype).itemsize, 8)


@functools.lru_cache(maxsize=None)
def _vmem_limit_bytes():
    """Scoped VMEM budget: half of physical, capped at 64 MiB.
    (v5e/v6e: 64 MiB of 128 MiB physical; v7x: 32 MiB of 64 MiB physical.)"""
    try:
        cap = int(pltpu.get_tpu_info().vmem_capacity_bytes)
    except Exception:
        return 32 * 1024 * 1024
    return int(min(cap // 2, 64 * 1024 * 1024))


# ----------------------------------------------------------------------------
# Tiled (grouped) linear:  x[M,K] @ w[G,K,N] + b[G,N] -> out[G,M,N]
# ----------------------------------------------------------------------------
def _grouped_linear_kernel(x_ref, w_ref, b_ref, o_ref, acc_ref):
    # refs (group dim squeezed): x [TM,TK], w [TK,TN], b [1,TN], o [TM,TN]
    @pl.when(pl.program_id(3) == 0)
    def _():
        acc_ref[...] = jnp.zeros_like(acc_ref)

    acc_ref[...] += jnp.dot(x_ref[...], w_ref[...],
                            preferred_element_type=jnp.float32)

    @pl.when(pl.program_id(3) == pl.num_programs(3) - 1)
    def _():
        o_ref[...] = (acc_ref[...] + b_ref[...].astype(jnp.float32)).astype(o_ref.dtype)


def grouped_linear(x, w, b, *, tm=512, tn=512, tk=512):
    """x: [M,K], w: [G,K,N], b: [G,N] -> [G,M,N] (G independent linears of the same x)."""
    M, K = x.shape
    G, _, N = w.shape
    dtype = x.dtype
    TM = _pick_tile(M, tm, _sublane_align(dtype))
    TN = _pick_tile(N, tn, 128)
    TK = _pick_tile(K, tk, 128)
    # Grid ordered (M, N, G, K): large parallel axes lead (v7x megacore balance),
    # reduction axis K stays last for the output-stationary accumulator.
    grid = (M // TM, N // TN, G, K // TK)
    itemsize = jnp.dtype(dtype).itemsize
    cost = pl.CostEstimate(
        flops=2 * G * M * N * K,
        transcendentals=0,
        bytes_accessed=(x.size + w.size + b.size + G * M * N) * itemsize)
    return pl.pallas_call(
        _grouped_linear_kernel,
        out_shape=jax.ShapeDtypeStruct((G, M, N), dtype),
        grid_spec=pltpu.PrefetchScalarGridSpec(
            num_scalar_prefetch=0,
            grid=grid,
            in_specs=[
                pl.BlockSpec((TM, TK), lambda i, j, g, k: (i, k)),
                pl.BlockSpec((None, TK, TN), lambda i, j, g, k: (g, k, j)),
                pl.BlockSpec((None, 1, TN), lambda i, j, g, k: (g, 0, j)),
            ],
            out_specs=pl.BlockSpec((None, TM, TN), lambda i, j, g, k: (g, i, j)),
            scratch_shapes=[pltpu.VMEM((TM, TN), jnp.float32)],
        ),
        compiler_params=pltpu.CompilerParams(
            dimension_semantics=("parallel", "parallel", "arbitrary", "arbitrary"),
            vmem_limit_bytes=_vmem_limit_bytes()),
        cost_estimate=cost,
    )(x, w, b.reshape(G, 1, N))


def linear(x, w, b):
    """x: [M,K] @ w: [K,N] + b: [N] -> [M,N]."""
    M = x.shape[0]
    N = w.shape[-1]
    return grouped_linear(x, w[None], b[None]).reshape(M, N)


# ----------------------------------------------------------------------------
# Flash-style multi-head attention kernel (heads handled inside the kernel)
# ----------------------------------------------------------------------------
def _mha_flash_kernel(q_ref, k_ref, v_ref, o_ref, m_sc, l_sc, acc_sc, *,
                      head_count, dim_per_head, scale, approx_recip):
    # refs (leading dims squeezed): q [TQ,D], k/v [TK,D], o [TQ,D]
    # grid = (B*Lq_tiles, Lk_tiles): axis 1 is the online-softmax reduction axis.
    ki = pl.program_id(1)

    @pl.when(ki == 0)
    def _():
        m_sc[...] = jnp.full_like(m_sc, -jnp.inf)
        l_sc[...] = jnp.zeros_like(l_sc)
        acc_sc[...] = jnp.zeros_like(acc_sc)

    # Softmax scale folded into q once per tile (one TQ*D mul per kv step instead of
    # H*TQ*TK). Operands keep their input dtype; MXU accumulates in f32.
    q = q_ref[...] * scale
    k = k_ref[...]
    v = v_ref[...]
    d = dim_per_head

    # TODO(synk): switch to lax.fori_loop over heads for head_count >= 8 to bound
    #             the f32 score/prob live ranges (VMEM spill at large TQ*TK).
    for h in range(head_count):                     # static unroll over heads
        lo = h * d
        qh = q[:, lo:lo + d]                        # [TQ, d]
        kh = k[:, lo:lo + d]                        # [TK, d]
        vh = v[:, lo:lo + d]                        # [TK, d]

        # scores [TQ, TK]: contract last dims directly (no explicit transpose)
        s = lax.dot_general(qh, kh, (((1,), (1,)), ((), ())),
                            preferred_element_type=jnp.float32)

        m_prev = m_sc[h]                            # [TQ, 1]
        m_new = jnp.maximum(m_prev, jnp.max(s, axis=-1, keepdims=True))
        alpha = jnp.exp(m_prev - m_new)
        p = jnp.exp(s - m_new)                      # [TQ, TK] f32
        l_sc[h] = alpha * l_sc[h] + jnp.sum(p, axis=-1, keepdims=True)
        pv = lax.dot_general(p.astype(v.dtype), vh, (((1,), (0,)), ((), ())),
                             preferred_element_type=jnp.float32)        # [TQ, d]
        acc_sc[h] = alpha * acc_sc[h] + pv
        m_sc[h] = m_new

    @pl.when(ki == pl.num_programs(1) - 1)
    def _():
        outs = []
        for h in range(head_count):
            # EUP approx reciprocal for low-precision dtypes; exact for f32 parity.
            inv = pl.reciprocal(l_sc[h], approx=approx_recip)
            outs.append(acc_sc[h] * inv)                   # [TQ, d]
        # single lane-dense store of the whole [TQ, D] tile
        o_ref[...] = jnp.concatenate(outs, axis=-1).astype(o_ref.dtype)


def _attention_scratch(head_count, tq, d):
    # NOTE: m/l lane-dim 1 pads to 128 in VMEM; acceptable at moderate head counts
    # (repacking to lane-major would add per-step XLU transposes).
    return [
        pltpu.VMEM((head_count, tq, 1), jnp.float32),   # running max m
        pltpu.VMEM((head_count, tq, 1), jnp.float32),   # running sum l
        pltpu.VMEM((head_count, tq, d), jnp.float32),   # running context acc
    ]


def _attention_cost(B, Lq, Lk, D, head_count, itemsize):
    return pl.CostEstimate(
        flops=4 * B * Lq * Lk * D,                        # QK^T + PV
        transcendentals=B * head_count * Lq * Lk,         # exp
        bytes_accessed=(B * Lq * D + 2 * B * Lk * D + B * Lq * D) * itemsize)


def attention(q, k, v, head_count):
    """q: [B,Lq,D], k/v: [B,Lk,D] -> context [B,Lq,D] (heads split in-kernel)."""
    B, Lq, D = q.shape
    Lk = k.shape[1]
    d = D // head_count
    dtype = q.dtype
    TQ = _pick_tile(Lq, 256, _sublane_align(dtype))
    TK = _pick_tile(Lk, 256, 128)
    n_q = Lq // TQ
    n_k = Lk // TK
    approx = bool(jnp.dtype(dtype) != jnp.float32)
    kernel = functools.partial(_mha_flash_kernel, head_count=head_count,
                               dim_per_head=d, scale=1.0 / math.sqrt(d),
                               approx_recip=approx)
    cost = _attention_cost(B, Lq, Lk, D, head_count, jnp.dtype(dtype).itemsize)
    return pl.pallas_call(
        kernel,
        out_shape=jax.ShapeDtypeStruct((B, Lq, D), dtype),
        grid_spec=pltpu.PrefetchScalarGridSpec(
            num_scalar_prefetch=0,
            # (B, Lq-tiles) flattened into one big leading "parallel" axis so v7x's
            # two TensorCores stay balanced even for small/odd B.
            grid=(B * n_q, n_k),
            in_specs=[
                pl.BlockSpec((None, TQ, D), lambda f, ki: (f // n_q, f % n_q, 0)),
                pl.BlockSpec((None, TK, D), lambda f, ki: (f // n_q, ki, 0)),
                pl.BlockSpec((None, TK, D), lambda f, ki: (f // n_q, ki, 0)),
            ],
            out_specs=pl.BlockSpec((None, TQ, D), lambda f, ki: (f // n_q, f % n_q, 0)),
            scratch_shapes=_attention_scratch(head_count, TQ, d),
        ),
        compiler_params=pltpu.CompilerParams(
            dimension_semantics=("parallel", "arbitrary"),
            vmem_limit_bytes=_vmem_limit_bytes()),
        cost_estimate=cost,
    )(q, k, v)


def attention_fused_qkv(qkv, head_count):
    """qkv: [3,B,L,D] (0=q, 1=k, 2=v from the fused projection) -> context [B,L,D].
    q/k/v tiles are picked straight out of the fused projection output via index
    maps, so no HBM slices or transposes are needed."""
    _, B, L, D = qkv.shape
    d = D // head_count
    dtype = qkv.dtype
    TQ = _pick_tile(L, 256, _sublane_align(dtype))
    TK = _pick_tile(L, 256, 128)
    n_q = L // TQ
    n_k = L // TK
    approx = bool(jnp.dtype(dtype) != jnp.float32)
    kernel = functools.partial(_mha_flash_kernel, head_count=head_count,
                               dim_per_head=d, scale=1.0 / math.sqrt(d),
                               approx_recip=approx)
    cost = _attention_cost(B, L, L, D, head_count, jnp.dtype(dtype).itemsize)
    return pl.pallas_call(
        kernel,
        out_shape=jax.ShapeDtypeStruct((B, L, D), dtype),
        grid_spec=pltpu.PrefetchScalarGridSpec(
            num_scalar_prefetch=0,
            grid=(B * n_q, n_k),
            in_specs=[
                pl.BlockSpec((None, None, TQ, D),
                             lambda f, ki: (0, f // n_q, f % n_q, 0)),
                pl.BlockSpec((None, None, TK, D),
                             lambda f, ki: (1, f // n_q, ki, 0)),
                pl.BlockSpec((None, None, TK, D),
                             lambda f, ki: (2, f // n_q, ki, 0)),
            ],
            out_specs=pl.BlockSpec((None, TQ, D), lambda f, ki: (f // n_q, f % n_q, 0)),
            scratch_shapes=_attention_scratch(head_count, TQ, d),
        ),
        compiler_params=pltpu.CompilerParams(
            dimension_semantics=("parallel", "arbitrary"),
            vmem_limit_bytes=_vmem_limit_bytes()),
        cost_estimate=cost,
    )(qkv, qkv, qkv)


# ----------------------------------------------------------------------------
# Module wrapper
# ----------------------------------------------------------------------------
def init_mha_params(key, head_count, model_dim, dtype=jnp.float32):
    """Deterministic parameter init (shapes match the nn.Linear layers)."""
    ks = jax.random.split(key, 8)
    s = 1.0 / math.sqrt(model_dim)

    def lin(kw, kb):
        w = jax.random.uniform(kw, (model_dim, model_dim), dtype, -s, s)
        b = jax.random.uniform(kb, (model_dim,), dtype, -s, s)
        return w, b

    wq, bq = lin(ks[0], ks[1])
    wk, bk = lin(ks[2], ks[3])
    wv, bv = lin(ks[4], ks[5])
    wf, bf = lin(ks[6], ks[7])
    return dict(wq=wq, bq=bq, wk=wk, bk=bk, wv=wv, bv=bv, wf=wf, bf=bf,
                # stacked weights for the fused QKV projection (self-attention)
                w_qkv=jnp.stack([wq, wk, wv]),      # [3, D, D]
                b_qkv=jnp.stack([bq, bk, bv]))      # [3, D]


def multi_headed_attention(params, key, value, query, head_count):
    """Forward pass matching MultiHeadedAttention(key, value, query) with
    mask=None, layer_cache=None, use_final_linear=True."""
    B, Lk, D = key.shape
    Lq = query.shape[1]
    assert D % head_count == 0

    if (key is query) and (value is query):
        # Self-attention: one fused QKV projection (activations read once), output
        # laid out as [3, B, L, D] and consumed directly by the attention kernel.
        qkv = grouped_linear(query.reshape(B * Lq, D),
                             params["w_qkv"], params["b_qkv"])     # [3, B*Lq, D]
        qkv = qkv.reshape(3, B, Lq, D)
        ctx = attention_fused_qkv(qkv, head_count)                  # [B, Lq, D]
    else:
        # Cross-attention: separate tiled projections, shared attention kernel.
        q_proj = linear(query.reshape(B * Lq, D), params["wq"], params["bq"]).reshape(B, Lq, D)
        k_proj = linear(key.reshape(B * Lk, D), params["wk"], params["bk"]).reshape(B, Lk, D)
        v_proj = linear(value.reshape(B * Lk, D), params["wv"], params["bv"]).reshape(B, Lk, D)
        ctx = attention(q_proj, k_proj, v_proj, head_count)         # [B, Lq, D]

    out = linear(ctx.reshape(B * Lq, D), params["wf"], params["bf"])
    return out.reshape(B, Lq, D)


def reference_mha(params, key, value, query, head_count):
    """Pure-JAX reference for verification."""
    B, Lk, D = key.shape
    Lq = query.shape[1]
    d = D // head_count

    def lin(x, w, b):
        return x @ w + b

    def shape_heads(x, L):
        return x.reshape(B, L, head_count, d).transpose(0, 2, 1, 3)

    q = shape_heads(lin(query, params["wq"], params["bq"]), Lq) / math.sqrt(d)
    k = shape_heads(lin(key, params["wk"], params["bk"]), Lk)
    v = shape_heads(lin(value, params["wv"], params["bv"]), Lk)
    scores = jnp.einsum("bhqd,bhkd->bhqk", q, k)
    attn = jax.nn.softmax(scores, axis=-1)
    ctx = jnp.einsum("bhqk,bhkd->bhqd", attn, v)
    ctx = ctx.transpose(0, 2, 1, 3).reshape(B, Lq, D)
    return lin(ctx, params["wf"], params["bf"])


# ----------------------------------------------------------------------------
if __name__ == "__main__":
    head_count = 4
    model_dim = 32
    batch = 2
    seq = 8

    root = jax.random.PRNGKey(0)
    k_params, k_x, k_k, k_v, k_q = jax.random.split(root, 5)
    params = init_mha_params(k_params, head_count, model_dim)

    # Self-attention (fused QKV projection + flash attention path).
    x = jax.random.normal(k_x, (batch, seq, model_dim), jnp.float32)
    out_self = multi_headed_attention(params, x, x, x, head_count)
    out_self = jax.block_until_ready(out_self)
    ref_self = reference_mha(params, x, x, x, head_count)
    assert out_self.shape == (batch, seq, model_dim)
    assert jnp.allclose(out_self, ref_self, atol=2e-3, rtol=2e-3), "self-attn mismatch"

    # Cross-attention (separate key/value/query tensors).
    key_in = jax.random.normal(k_k, (batch, seq, model_dim), jnp.float32)
    value_in = jax.random.normal(k_v, (batch, seq, model_dim), jnp.float32)
    query_in = jax.random.normal(k_q, (batch, seq, model_dim), jnp.float32)
    out_cross = multi_headed_attention(params, key_in, value_in, query_in, head_count)
    out_cross = jax.block_until_ready(out_cross)
    ref_cross = reference_mha(params, key_in, value_in, query_in, head_count)
    assert jnp.allclose(out_cross, ref_cross, atol=2e-3, rtol=2e-3), "cross-attn mismatch"

    print("KERNEL_OK")
</pallas_src>

<mosaic_0001>
module attributes {stable_mosaic.version = 11 : i64} {
  func.func @_grouped_linear_kernel(%arg0: i32, %arg1: i32, %arg2: i32, %arg3: i32, %arg4: memref<16x32xf32, #tpu.memory_space<vmem>>, %arg5: memref<1x32x32xf32, #tpu.memory_space<vmem>>, %arg6: memref<1x1x32xf32, #tpu.memory_space<vmem>>, %arg7: memref<1x16x32xf32, #tpu.memory_space<vmem>>, %arg8: memref<16x32xf32, #tpu.memory_space<vmem>>) attributes {dimension_semantics = [#tpu.dimension_semantics<parallel>, #tpu.dimension_semantics<parallel>, #tpu.dimension_semantics<arbitrary>, #tpu.dimension_semantics<arbitrary>], iteration_bounds = array<i64: 1, 1, 3, 1>, scalar_prefetch = 0 : i64, scratch_operands = 1 : i64, tpu.core_type = #tpu.core_type<tc>, window_params = [{transform_indices = @transform_0, window_bounds = array<i64: 16, 32>}, {transform_indices = @transform_1, window_bounds = array<i64: 1, 32, 32>}, {transform_indices = @transform_2, window_bounds = array<i64: 1, 1, 32>}, {transform_indices = @transform_3, window_bounds = array<i64: 1, 16, 32>}]} {
    %c0_i32 = arith.constant 0 : i32
    %0 = arith.cmpi eq, %arg3, %c0_i32 : i32
    %1 = arith.extui %0 : i1 to i32
    %c0_i32_0 = arith.constant 0 : i32
    %2 = arith.cmpi ne, %1, %c0_i32_0 : i32
    scf.if %2 {
      %cst_11 = arith.constant 0.000000e+00 : f32
      %13 = vector.broadcast %cst_11 : f32 to vector<16x32xf32>
      %c0_12 = arith.constant 0 : index
      %c0_13 = arith.constant 0 : index
      %14 = vector.load %arg8[%c0_12, %c0_13] : memref<16x32xf32, #tpu.memory_space<vmem>>, vector<16x32xf32>
      tpu.vector_store %arg8[%c0_12, %c0_13], %13 {strides = array<i32>} : memref<16x32xf32, #tpu.memory_space<vmem>>, vector<16x32xf32>,
    } else {
    }
    %c0 = arith.constant 0 : index
    %c0_1 = arith.constant 0 : index
    %3 = vector.load %arg8[%c0, %c0_1] : memref<16x32xf32, #tpu.memory_space<vmem>>, vector<16x32xf32>
    %c0_2 = arith.constant 0 : index
    %c0_3 = arith.constant 0 : index
    %4 = vector.load %arg4[%c0_2, %c0_3] : memref<16x32xf32, #tpu.memory_space<vmem>>, vector<16x32xf32>
    %c0_4 = arith.constant 0 : index
    %c0_5 = arith.constant 0 : index
    %c0_6 = arith.constant 0 : index
    %5 = vector.load %arg5[%c0_4, %c0_5, %c0_6] : memref<1x32x32xf32, #tpu.memory_space<vmem>>, vector<1x32x32xf32>
    %6 = vector.shape_cast %5 : vector<1x32x32xf32> to vector<32x32xf32>
    %cst = arith.constant dense<0.000000e+00> : vector<16x32xf32>
    %7 = tpu.matmul %4, %6, %cst {dimension_numbers = #tpu.dot_dimension_numbers<[1], [0], [0], [1], [0, 0, 1, 1], [], []>} : vector<16x32xf32>, vector<32x32xf32>, vector<16x32xf32> -> vector<16x32xf32>
    %8 = arith.addf %3, %7 : vector<16x32xf32>
    %c0_7 = arith.constant 0 : index
    %c0_8 = arith.constant 0 : index
    %9 = vector.load %arg8[%c0_7, %c0_8] : memref<16x32xf32, #tpu.memory_space<vmem>>, vector<16x32xf32>
    tpu.vector_store %arg8[%c0_7, %c0_8], %8 {strides = array<i32>} : memref<16x32xf32, #tpu.memory_space<vmem>>, vector<16x32xf32>,
    %c0_i32_9 = arith.constant 0 : i32
    %10 = arith.cmpi eq, %arg3, %c0_i32_9 : i32
    %11 = arith.extui %10 : i1 to i32
    %c0_i32_10 = arith.constant 0 : i32
    %12 = arith.cmpi ne, %11, %c0_i32_10 : i32
    scf.if %12 {
      %c0_11 = arith.constant 0 : index
      %c0_12 = arith.constant 0 : index
      %13 = vector.load %arg8[%c0_11, %c0_12] : memref<16x32xf32, #tpu.memory_space<vmem>>, vector<16x32xf32>
      %c0_13 = arith.constant 0 : index
      %c0_14 = arith.constant 0 : index
      %c0_15 = arith.constant 0 : index
      %14 = vector.load %arg6[%c0_13, %c0_14, %c0_15] : memref<1x1x32xf32, #tpu.memory_space<vmem>>, vector<1x1x32xf32>
      %15 = vector.shape_cast %14 : vector<1x1x32xf32> to vector<1x32xf32>
      %16 = vector.broadcast %15 : vector<1x32xf32> to vector<16x32xf32>
      %17 = arith.addf %13, %16 : vector<16x32xf32>
      %c0_16 = arith.constant 0 : index
      %c0_17 = arith.constant 0 : index
      %c0_18 = arith.constant 0 : index
      %18 = vector.load %arg7[%c0_16, %c0_17, %c0_18] : memref<1x16x32xf32, #tpu.memory_space<vmem>>, vector<1x16x32xf32>
      %19 = vector.shape_cast %18 : vector<1x16x32xf32> to vector<16x32xf32>
      %20 = vector.shape_cast %17 : vector<16x32xf32> to vector<1x16x32xf32>
      tpu.vector_store %arg7[%c0_16, %c0_17, %c0_18], %20 {strides = array<i32>} : memref<1x16x32xf32, #tpu.memory_space<vmem>>, vector<1x16x32xf32>,
    } else {
    }
    return
  }
  func.func @transform_0(%arg0: i32, %arg1: i32, %arg2: i32, %arg3: i32) -> (i32, i32) {
    %c0_i32 = arith.constant 0 : i32
    return %arg0, %arg3 : i32, i32
  }
  func.func @transform_1(%arg0: i32, %arg1: i32, %arg2: i32, %arg3: i32) -> (i32, i32, i32) {
    %c0_i32 = arith.constant 0 : i32
    return %arg2, %arg3, %arg1 : i32, i32, i32
  }
  func.func @transform_2(%arg0: i32, %arg1: i32, %arg2: i32, %arg3: i32) -> (i32, i32, i32) {
    %c0_i32 = arith.constant 0 : i32
    %c0_i32_0 = arith.constant 0 : i32
    return %arg2, %c0_i32, %arg1 : i32, i32, i32
  }
  func.func @transform_3(%arg0: i32, %arg1: i32, %arg2: i32, %arg3: i32) -> (i32, i32, i32) {
    %c0_i32 = arith.constant 0 : i32
    return %arg2, %arg0, %arg1 : i32, i32, i32
  }
}

</mosaic_0001>

<llo_original>
// kernel: tpu_custom_call.1
$region0: #{tpu_custom_call.1}
  #allocation0 [shape = 'u32[]', space=smem, size = 0x4, offset = 0x4, fixed_abs, tag = 'smem constant byte address 0x4 - core index']
  #allocation1 [shape = 'u32[144,128]{1,0:T(1,128)}', space=vmem, size = 0x12000, scoped, tag = 'internal scratch']
  #allocation2 [shape = 'f32[16,32]{1,0:T(8,128)}', space=vmem, size = 0x2000, scoped, tag = 'scratch operand']
  %s0 = inlined_call_operand.hbm [shape: f32[16,32], index: 0, kind: input, shape index: {}]
  %s1 = inlined_call_operand.hbm [shape: f32[3,32,32], index: 1, kind: input, shape index: {}]
  %s2 = inlined_call_operand.vmem [shape: f32[3,1,32], index: 2, kind: input, shape index: {}]
  %s3 = inlined_call_operand.hbm [shape: f32[3,16,32], index: 3, kind: output, shape index: {}]
  %s4 = sld [smem:[#allocation0]]
  $region61: #{tpu_custom_call.1} parent=0
    _
  %s6 = ssub.s32 1, %s4
  %s7 = scalar_select 0, %s6, %s4
  $region1: #{tpu_custom_call.1} parent=0
    #allocation3 [shape = 'u8[8192]{0}', space=vmem, size = 0x2000, scoped, tag = 'input window, operand 0, single buffered']
    #allocation4 [shape = 's32[2]{0}', space=sflag, size = 0x8, scoped, tag = 'scoped memory for tpu_custom_call.1']
    #allocation5 [shape = 's32[2]{0}', space=sflag, size = 0x8, scoped, tag = 'scoped memory for tpu_custom_call.1']
    #allocation6 [shape = 'u8[32768]{0}', space=vmem, size = 0x8000, scoped, tag = 'input window, operand 1']
    #allocation7 [shape = 's32[2]{0}', space=sflag, size = 0x8, scoped, tag = 'scoped memory for tpu_custom_call.1']
    #allocation8 [shape = 'u8[16384]{0}', space=vmem, size = 0x4000, scoped, tag = 'output window, operand 0']
    %8 = vsyncpa [#allocation4], 0
    %9 = vsyncpa [#allocation7], 0
    %s10 = scalar_lea.sflag [#allocation7], 1
    %11 = vsyncpa %s10, 0
    %12 = vsyncpa [#allocation5], 0
    %s13 = scalar_lea.sflag [#allocation5], 1
    %14 = vsyncpa %s13, 0
    loop: start=0, step=1, limit=5
    $region2: #{tpu_custom_call.1} parent=1 // loop_pre_header
      _
    $region3: #{tpu_custom_call.1} parent=1 // loop_header
      %s16 = sphi 0, %s20
      %p17 = scmp.ge.s32.totalorder %s16, 5
      %s23 = sphi 0, %s49
      %s24 = sphi 0, %s45
      %s25 = sphi 0, %s41
      %s26 = sphi 0, %s37
      %s27 = sphi 0, %s23
      %s28 = sphi 0, %s24
      %s29 = sphi 0, %s25
      %s30 = sphi 0, %s26
      %s31 = sphi 0, %s27
      %s32 = sphi 0, %s28
      %s33 = sphi 0, %s29
      %s34 = sphi 0, %s30
      %s54 = sphi 0, %s56
      %s57 = sphi 0, %s54
      %s58 = sphi 0, %s57
      %s74 = sphi 0, %s58
      %s84 = sphi 0, %s86
      %s87 = sphi 0, %s84
      %s88 = sphi 0, %s87
      %s104 = sphi 0, %s88
      %s112 = sphi 0, %s114
      %s115 = sphi 0, %s112
      %s116 = sphi 0, %s115
      %s132 = sphi 0, %s116
      %s142 = sphi 0, %s144
      %s145 = sphi 0, %s142
      %s146 = sphi 0, %s145
      %s162 = sphi 0, %s146
    $region4: #{tpu_custom_call.1} parent=1 // loop_header_branch
      %19 = sbr.rel (%p17) target = $region8
    $region5: #{tpu_custom_call.1} parent=1 // loop_body
      %s21 = ssub.s32 %s16, 1
      %s22 = ssub.s32 %s16, 2
      %s35 = sadd.s32 1, %s26
      %p36 = scmp.ge.s32.totalorder %s35, 1
      %s37 = scalar_select %p36, 0, %s35
      %s38 = sadd.s32 1, %s25
      %s39 = scalar_select %p36, %s38, %s25
      %p40 = scmp.ge.s32.totalorder %s39, 3
      %s41 = scalar_select %p40, 0, %s39
      %s42 = sadd.s32 1, %s24
      %s43 = scalar_select %p40, %s42, %s24
      %p44 = scmp.ge.s32.totalorder %s43, 1
      %s45 = scalar_select %p44, 0, %s43
      %s46 = sadd.s32 1, %s23
      %s47 = scalar_select %p44, %s46, %s23
      %p48 = scmp.ge.s32.totalorder %s47, 1
      %s49 = scalar_select %p48, 0, %s47
      %s50 = ssub.s32 %s23, %s49
      %s51 = ssub.s32 %s26, %s37
      %s52 = sor.u32 %s50, %s51
      %p53 = scmp.eq.s32.totalorder %s52, 0
      %s55 = sadd.s32 %s54, 1
      %s56 = scalar_select %p53, %s54, %s55
      %p59 = pneg %p53
      %p60 = scmp.eq.s32.totalorder %s16, 2
      %p61 = por %p59, %p60
      %p62 = scmp.ne.s32.totalorder %s54, %s57
      %p63 = scmp.eq.s32.totalorder %s16, 0
      %p64 = por %p62, %p63
      %p65 = scmp.ne.s32.totalorder %s54, %s57
      %p66 = scmp.eq.s32.totalorder %s21, 2
      %p67 = por %p65, %p66
      %p68 = scmp.ne.s32.totalorder %s57, %s58
      %p69 = scmp.eq.s32.totalorder %s21, 0
      %p70 = por %p68, %p69
      %p71 = scmp.ne.s32.totalorder %s57, %s58
      %p72 = scmp.eq.s32.totalorder %s22, 2
      %p73 = por %p71, %p72
      %p75 = scmp.ne.s32.totalorder %s58, %s74
      %p76 = scmp.eq.s32.totalorder %s22, 0
      %p77 = por %p75, %p76
      %s78 = ssub.s32 %s25, %s41
      %s79 = ssub.s32 %s26, %s37
      %s80 = sor.u32 %s78, %s79
      %s81 = ssub.s32 %s24, %s45
      %s82 = sor.u32 %s80, %s81
      %p83 = scmp.eq.s32.totalorder %s82, 0
      %s85 = sadd.s32 %s84, 1
      %s86 = scalar_select %p83, %s84, %s85
      %p89 = pneg %p83
      %p90 = scmp.eq.s32.totalorder %s16, 2
      %p91 = por %p89, %p90
      %p92 = scmp.ne.s32.totalorder %s84, %s87
      %p93 = scmp.eq.s32.totalorder %s16, 0
      %p94 = por %p92, %p93
      %p95 = scmp.ne.s32.totalorder %s84, %s87
      %p96 = scmp.eq.s32.totalorder %s21, 2
      %p97 = por %p95, %p96
      %p98 = scmp.ne.s32.totalorder %s87, %s88
      %p99 = scmp.eq.s32.totalorder %s21, 0
      %p100 = por %p98, %p99
      %p101 = scmp.ne.s32.totalorder %s87, %s88
      %p102 = scmp.eq.s32.totalorder %s22, 2
      %p103 = por %p101, %p102
      %p105 = scmp.ne.s32.totalorder %s88, %s104
      %p106 = scmp.eq.s32.totalorder %s22, 0
      %p107 = por %p105, %p106
      %s108 = ssub.s32 %s25, %s41
      %s109 = ssub.s32 %s24, %s45
      %s110 = sor.u32 %s108, %s109
      %p111 = scmp.eq.s32.totalorder %s110, 0
      %s113 = sadd.s32 %s112, 1
      %s114 = scalar_select %p111, %s112, %s113
      %p117 = pneg %p111
      %p118 = scmp.eq.s32.totalorder %s16, 2
      %p119 = por %p117, %p118
      %p120 = scmp.ne.s32.totalorder %s112, %s115
      %p121 = scmp.eq.s32.totalorder %s16, 0
      %p122 = por %p120, %p121
      %p123 = scmp.ne.s32.totalorder %s112, %s115
      %p124 = scmp.eq.s32.totalorder %s21, 2
      %p125 = por %p123, %p124
      %p126 = scmp.ne.s32.totalorder %s115, %s116
      %p127 = scmp.eq.s32.totalorder %s21, 0
      %p128 = por %p126, %p127
      %p129 = scmp.ne.s32.totalorder %s115, %s116
      %p130 = scmp.eq.s32.totalorder %s22, 2
      %p131 = por %p129, %p130
      %p133 = scmp.ne.s32.totalorder %s116, %s132
      %p134 = scmp.eq.s32.totalorder %s22, 0
      %p135 = por %p133, %p134
      %s136 = ssub.s32 %s25, %s41
      %s137 = ssub.s32 %s23, %s49
      %s138 = sor.u32 %s136, %s137
      %s139 = ssub.s32 %s24, %s45
      %s140 = sor.u32 %s138, %s139
      %p141 = scmp.eq.s32.totalorder %s140, 0
      %s143 = sadd.s32 %s142, 1
      %s144 = scalar_select %p141, %s142, %s143
      %p147 = pneg %p141
      %p148 = scmp.eq.s32.totalorder %s16, 2
      %p149 = por %p147, %p148
      %p150 = scmp.ne.s32.totalorder %s142, %s145
      %p151 = scmp.eq.s32.totalorder %s16, 0
      %p152 = por %p150, %p151
      %p153 = scmp.ne.s32.totalorder %s142, %s145
      %p154 = scmp.eq.s32.totalorder %s21, 2
      %p155 = por %p153, %p154
      %p156 = scmp.ne.s32.totalorder %s145, %s146
      %p157 = scmp.eq.s32.totalorder %s21, 0
      %p158 = por %p156, %p157
      %p159 = scmp.ne.s32.totalorder %s145, %s146
      %p160 = scmp.eq.s32.totalorder %s22, 2
      %p161 = por %p159, %p160
      %p163 = scmp.ne.s32.totalorder %s146, %s162
      %p164 = scmp.eq.s32.totalorder %s22, 0
      %p165 = por %p163, %p164
      %p166 = scmp.le.s32.totalorder 1, %s16
      %p167 = scmp.lt.s32.totalorder %s16, 4
      %p168 = pnand %p166, %p167
      %p169 = pneg %p168
      // Predicated region
      $region9: #{tpu_custom_call.1} parent=5 // pred_check
        _
      $region10: #{tpu_custom_call.1} parent=5 // pred_check_branch
        %171 = sbr.rel (%p168) target = $region12
      $region11: #{tpu_custom_call.1} parent=5 // pred_region
        %s172 = ssub.s32 %s16, 1
        // Predicated region
        $region13: #{tpu_custom_call.1} parent=11 // pred_check
          %p173 = pneg %p70
        $region14: #{tpu_custom_call.1} parent=11 // pred_check_branch
          %175 = sbr.rel (%p173) target = $region16
        $region15: #{tpu_custom_call.1} parent=11 // pred_region
          %s176 = smul.u32 2, %s27
          %s178 = ssub.s32 256, 256
          %179 = vsyncadd [#allocation4], %s178
          %s180 = sadd.s32 %s30, %s176
          %s181 = smul.addr %s180, 128
          %s182 = scalar_lea.hbm %s0, %s181
          %s183 = sshll.u32 [#allocation3], 4
          %s184 = int_to_ptr.vmem [resolvable:$true] %s183
          %189 = dma.hbm_to_vmem [thread:$0]  %s182, 256, %s184, [#allocation4], 128, 128, 8
        $region16: #{tpu_custom_call.1} parent=11 // pred_fallthru
          _
      $region12: #{tpu_custom_call.1} parent=5 // pred_fallthru
        _
      %p190 = scmp.lt.s32.totalorder %s16, 3
      // Predicated region
      $region17: #{tpu_custom_call.1} parent=5 // pred_check
        %p191 = pneg %p190
      $region18: #{tpu_custom_call.1} parent=5 // pred_check_branch
        %193 = sbr.rel (%p191) target = $region20
      $region19: #{tpu_custom_call.1} parent=5 // pred_region
        // Predicated region
        $region21: #{tpu_custom_call.1} parent=19 // pred_check
          %p194 = pneg %p94
        $region22: #{tpu_custom_call.1} parent=19 // pred_check_branch
          %196 = sbr.rel (%p194) target = $region24
        $region23: #{tpu_custom_call.1} parent=19 // pred_region
          %s197 = sand.u32 %s84, 1
          %s198 = scalar_lea.sflag [#allocation7], %s197
          %s199 = sand.u32 %s84, 1
          %s200 = smul.addr %s199, 32
          %s201 = scalar_lea.vmem [#allocation6], %s200
          %s202 = smul.u32 4, %s26
          %s204 = ssub.s32 512, 512
          %205 = vsyncadd %s198, %s204
          %s206 = sadd.s32 %s24, %s202
          %s207 = smul.addr %s25, 4
          %s208 = sadd.s32 %s206, %s207
          %s209 = smul.addr %s208, 128
          %s210 = scalar_lea.hbm %s1, %s209
          %s211 = sshll.u32 %s201, 4
          %s212 = int_to_ptr.vmem [resolvable:$true] %s211
          %217 = dma.hbm_to_vmem [thread:$0]  %s210, 512, %s212, %s198, 128, 128, 8
        $region24: #{tpu_custom_call.1} parent=19 // pred_fallthru
          _
        // Predicated region
        $region25: #{tpu_custom_call.1} parent=19 // pred_check
          %p218 = pneg %p122
        $region26: #{tpu_custom_call.1} parent=19 // pred_check_branch
          %220 = sbr.rel (%p218) target = $region28
        $region27: #{tpu_custom_call.1} parent=19 // pred_region
          %p221 = scmp.lt.s32.totalorder %s25, 2
          %s222 = scalar_select %p221, %s25, 2
          %p223 = scmp.lt.s32.totalorder %s24, 0
          %s224 = scalar_select %p223, %s24, 0
          %s225 = sadd.s32 %s224, %s222
          %s226 = scalar_lea.vmem %s2, %s225
        $region28: #{tpu_custom_call.1} parent=19 // pred_fallthru
          _
      $region20: #{tpu_custom_call.1} parent=5 // pred_fallthru
        _
      %p227 = scmp.le.s32.totalorder 1, %s16
      %p228 = scmp.lt.s32.totalorder %s16, 4
      %p229 = pnand %p227, %p228
      %p230 = pneg %p229
      // Predicated region
      $region29: #{tpu_custom_call.1} parent=5 // pred_check
        _
      $region30: #{tpu_custom_call.1} parent=5 // pred_check_branch
        %232 = sbr.rel (%p229) target = $region32
      $region31: #{tpu_custom_call.1} parent=5 // pred_region
        %s233 = ssub.s32 %s16, 1
        // Predicated region
        $region33: #{tpu_custom_call.1} parent=31 // pred_check
          %p234 = pneg %p70
        $region34: #{tpu_custom_call.1} parent=31 // pred_check_branch
          %236 = sbr.rel (%p234) target = $region36
        $region35: #{tpu_custom_call.1} parent=31 // pred_region
          %237 = dma.done [#allocation4], 256
        $region36: #{tpu_custom_call.1} parent=31 // pred_fallthru
          _
        %s238 = sand.u32 %s87, 1
        %s239 = scalar_lea.sflag [#allocation7], %s238
        %s240 = sand.u32 %s87, 1
        %s241 = smul.addr %s240, 32
        %s242 = scalar_lea.vmem [#allocation6], %s241
        // Predicated region
        $region37: #{tpu_custom_call.1} parent=31 // pred_check
          %p243 = pneg %p100
        $region38: #{tpu_custom_call.1} parent=31 // pred_check_branch
          %245 = sbr.rel (%p243) target = $region40
        $region39: #{tpu_custom_call.1} parent=31 // pred_region
          %246 = dma.done %s239, 512
        $region40: #{tpu_custom_call.1} parent=31 // pred_fallthru
          _
        %p247 = pneg %p70
        %p248 = pneg %p67
        %s249 = sand.u32 %s87, 1
        %s250 = scalar_lea.sflag [#allocation7], %s249
        %s251 = sand.u32 %s87, 1
        %s252 = smul.addr %s251, 32
        %s253 = scalar_lea.vmem [#allocation6], %s252
        %p254 = pneg %p100
        %p255 = pneg %p97
        %p256 = scmp.lt.s32.totalorder %s29, 2
        %s257 = scalar_select %p256, %s29, 2
        %p258 = scmp.lt.s32.totalorder %s28, 0
        %s259 = scalar_select %p258, %s28, 0
        %s260 = sadd.s32 %s259, %s257
        %s261 = scalar_lea.vmem %s2, %s260
        %p262 = pneg %p128
        %p263 = pneg %p125
        %p264 = pneg %p158
        %p265 = pneg %p155
        %s266 = sand.u32 %s145, 1
        %s267 = scalar_lea.sflag [#allocation5], %s266
        %s268 = sand.u32 %s145, 1
        %s269 = smul.addr %s268, 16
        %s270 = scalar_lea.vmem [#allocation8], %s269
        %s271 = smul.u32 2, %s27
        %s272 = smul.u32 4, %s30
        %p273 = scmp.lt.s32.totalorder %s29, 2
        %s274 = scalar_select %p273, %s29, 2
        %p275 = scmp.lt.s32.totalorder %s28, 0
        %s276 = scalar_select %p275, %s28, 0
        %s277 = sadd.s32 %s276, %s274
        %s278 = scalar_lea.vmem %s2, %s277
        %s279 = smul.u32 2, %s27
        %p280 = scmp.eq.s32.totalorder %s30, 0
        // Predicated region
        $region41: #{tpu_custom_call.1} parent=31 // pred_check
          %p281 = pneg %p280
        $region42: #{tpu_custom_call.1} parent=31 // pred_check_branch
          %283 = sbr.rel (%p281) target = $region44
        $region43: #{tpu_custom_call.1} parent=31 // pred_region
          %vm284 = vcmask 261120
          %285 = vst.msk [vmem:[#allocation2] sm:$0xff] %vm284, 0.0
          %286 = vst.msk [vmem:[#allocation2 + $0x8] sm:$0xff] %vm284, 0.0
        $region44: #{tpu_custom_call.1} parent=31 // pred_fallthru
          _
        %v287 = vld [vmem:[#allocation2] sm:$0xff]
        %v288 = vld [vmem:[#allocation2 + $0x8] sm:$0xff]
        %v289 = vld [vmem:[#allocation3] sm:$0xff]
        %v290 = vld [vmem:[#allocation3 + $0x8] sm:$0xff]
        %v291 = vld [vmem:[%s242] sm:$0xff]
        %v292 = vld [vmem:[%s242 + $0x8] sm:$0xff]
        %v293 = vld [vmem:[%s242 + $0x10] sm:$0xff]
        %v294 = vld [vmem:[%s242 + $0x18] sm:$0xff]
        %vm295 = vcmask 261120
        %v297 = vsel %vm295, %v289, 0
        %v300 = vsel %vm295, %v290, 0
        %302 = vmatprep.subr.mxu0 0.0
        %303 = vmatpush1.msra.mxu0 %v291
        %304 = vmatprep.subr.mxu0 0.0
        %305 = vmatpush1.msra.mxu0 %v292
        %306 = vmatprep.subr.mxu0 0.0
        %307 = vmatpush1.msra.mxu0 %v293
        %308 = vmatprep.subr.mxu0 0.0
        %309 = vmatpush1.msra.mxu0 %v294
        %310 = vmatprep.subr.mxu0 0.0
        %311 = vmatpush1.msra.mxu0 0.0
        %312 = vmatprep.subr.mxu0 0.0
        %313 = vmatpush1.msra.mxu0 0.0
        %314 = vmatprep.subr.mxu0 0.0
        %315 = vmatpush1.msra.mxu0 0.0
        %316 = vmatprep.subr.mxu0 0.0
        %317 = vmatpush1.msra.mxu0 0.0
        %318 = vmatprep.subr.mxu0 0.0
        %319 = vmatpush1.msra.mxu0 0.0
        %320 = vmatprep.subr.mxu0 0.0
        %321 = vmatpush1.msra.mxu0 0.0
        %322 = vmatprep.subr.mxu0 0.0
        %323 = vmatpush1.msra.mxu0 0.0
        %324 = vmatprep.subr.mxu0 0.0
        %325 = vmatpush1.msra.mxu0 0.0
        %326 = vmatprep.subr.mxu0 0.0
        %327 = vmatpush1.msra.mxu0 0.0
        %328 = vmatprep.subr.mxu0 0.0
        %329 = vmatpush1.msra.mxu0 0.0
        %330 = vmatprep.subr.mxu0 0.0
        %331 = vmatpush1.msra.mxu0 0.0
        %332 = vmatprep.subr.mxu0 0.0
        %333 = vmatpush1.msra.mxu0 0.0
        %334 = vmatprep.subr.mxu0 0.0
        %335 = vmatpush1.msra.mxu0 0.0
        %336 = vmatprep.subr.mxu0 0.0
        %337 = vmatpush1.msra.mxu0 0.0
        %338 = vmatprep.subr.mxu0 0.0
        %339 = vmatpush1.msra.mxu0 0.0
        %340 = vmatprep.subr.mxu0 0.0
        %341 = vmatpush1.msra.mxu0 0.0
        %342 = vmatprep.subr.mxu0 0.0
        %343 = vmatpush1.msra.mxu0 0.0
        %344 = vmatprep.subr.mxu0 0.0
        %345 = vmatpush1.msra.mxu0 0.0
        %346 = vmatprep.subr.mxu0 0.0
        %347 = vmatpush1.msra.mxu0 0.0
        %348 = vmatprep.subr.mxu0 0.0
        %349 = vmatpush1.msra.mxu0 0.0
        %350 = vmatprep.subr.mxu0 0.0
        %351 = vmatpush1.msra.mxu0 0.0
        %352 = vmatprep.subr.mxu0 0.0
        %353 = vmatpush1.msra.mxu0 0.0
        %354 = vmatprep.subr.mxu0 0.0
        %355 = vmatpush1.msra.mxu0 0.0
        %356 = vmatprep.subr.mxu0 0.0
        %357 = vmatpush1.msra.mxu0 0.0
        %358 = vmatprep.subr.mxu0 0.0
        %359 = vmatpush1.msra.mxu0 0.0
        %360 = vmatprep.subr.mxu0 0.0
        %361 = vmatpush1.msra.mxu0 0.0
        %362 = vmatprep.subr.mxu0 0.0
        %363 = vmatpush1.msra.mxu0 0.0
        %364 = vmatprep.subr.mxu0 0.0
        %365 = vmatpush1.msra.mxu0 0.0
        %366 = vmatprep.mubr.f32.mxu0 0.0
        %367 = vmatmul.mubr.f32.gmra.mrb[0].mxu0 %v297
        %v368 = vpop.f32.mrb[0].mxu0
        %v369 = vadd.f32 0.0, %v368
        %v370 = vpop.f32.mrb[0].mxu0
        %371 = vmatprep.mubr.f32.mxu0 0.0
        %372 = vmatmul.mubr.f32.gmra.mrb[0].mxu0 %v300
        %v373 = vpop.f32.mrb[0].mxu0
        %v374 = vadd.f32 0.0, %v373
        %v375 = vpop.f32.mrb[0].mxu0
        %376 = vdwg.mxu0
        %v377 = vadd.f32 %v287, %v369
        %v378 = vadd.f32 %v288, %v374
        %379 = vst.msk [vmem:[#allocation2] sm:$0xff] %vm295, %v377
        %380 = vst.msk [vmem:[#allocation2 + $0x8] sm:$0xff] %vm295, %v378
        // Predicated region
        $region45: #{tpu_custom_call.1} parent=31 // pred_check
          %p381 = pneg %p280
        $region46: #{tpu_custom_call.1} parent=31 // pred_check_branch
          %383 = sbr.rel (%p381) target = $region48
        $region47: #{tpu_custom_call.1} parent=31 // pred_region
          %v384 = vld [vmem:[#allocation2] sm:$0xff]
          %v385 = vld [vmem:[#allocation2 + $0x8] sm:$0xff]
          %v386 = vld [vmem:[%s278] sm:$0x1]
          %v388 = vlaneseq
          %v389 = vshrl.u32 %v388, 7
          %v390 = vsub.s32 0, %v389
          %v391 = vrot.slane %v386, %v390
          %v393 = vadd.f32 %v384, %v391
          %v394 = vadd.f32 %v385, %v391
          %395 = vst.msk [vmem:[%s270] sm:$0xff] %vm295, %v393
          %396 = vst.msk [vmem:[%s270 + $0x8] sm:$0xff] %vm295, %v394
        $region48: #{tpu_custom_call.1} parent=31 // pred_fallthru
          _
        %s397 = sand.u32 %s145, 1
        %s398 = scalar_lea.sflag [#allocation5], %s397
        %s399 = sand.u32 %s145, 1
        %s400 = smul.addr %s399, 16
        %s401 = scalar_lea.vmem [#allocation8], %s400
        // Predicated region
        $region49: #{tpu_custom_call.1} parent=31 // pred_check
          %p402 = pneg %p155
        $region50: #{tpu_custom_call.1} parent=31 // pred_check_branch
          %404 = sbr.rel (%p402) target = $region52
        $region51: #{tpu_custom_call.1} parent=31 // pred_region
          %s405 = smul.u32 2, %s27
          %s407 = ssub.s32 256, 256
          %408 = vsyncadd %s398, %s407
          %s409 = sadd.s32 %s28, %s405
          %s410 = smul.addr %s29, 2
          %s411 = sadd.s32 %s409, %s410
          %s412 = smul.addr %s411, 128
          %s413 = scalar_lea.hbm %s3, %s412
          %s414 = sshll.u32 %s401, 4
          %s415 = int_to_ptr.vmem [resolvable:$true] %s414
          %420 = dma.vmem_to_hbm [thread:$0]  %s415, 256, %s413, %s398, 128, 128, 8
        $region52: #{tpu_custom_call.1} parent=31 // pred_fallthru
          _
      $region32: #{tpu_custom_call.1} parent=5 // pred_fallthru
        _
      %p421 = scmp.le.s32.totalorder 2, %s16
      // Predicated region
      $region53: #{tpu_custom_call.1} parent=5 // pred_check
        %p422 = pneg %p421
      $region54: #{tpu_custom_call.1} parent=5 // pred_check_branch
        %424 = sbr.rel (%p422) target = $region56
      $region55: #{tpu_custom_call.1} parent=5 // pred_region
        %s425 = ssub.s32 %s16, 2
        // Predicated region
        $region57: #{tpu_custom_call.1} parent=55 // pred_check
          %p426 = pneg %p161
        $region58: #{tpu_custom_call.1} parent=55 // pred_check_branch
          %428 = sbr.rel (%p426) target = $region60
        $region59: #{tpu_custom_call.1} parent=55 // pred_region
          %s429 = sand.u32 %s146, 1
          %s430 = scalar_lea.sflag [#allocation5], %s429
          %s431 = sand.u32 %s146, 1
          %s432 = smul.addr %s431, 16
          %s433 = scalar_lea.vmem [#allocation8], %s432
          %434 = dma.done %s430, 256
        $region60: #{tpu_custom_call.1} parent=55 // pred_fallthru
          _
      $region56: #{tpu_custom_call.1} parent=5 // pred_fallthru
        _
    $region6: #{tpu_custom_call.1} parent=1 // loop_footer
      %s20 = sadd.s32 1, %s16
    $region7: #{tpu_custom_call.1} parent=1 // loop_footer_branch
      %15 = sbr.rel target = $region3
    $region8: #{tpu_custom_call.1} parent=1 // loop_exit
      _
    %435 = vsyncpa [#allocation4], 1
    %s436 = scalar_lea.sflag [#allocation4], 1
    %437 = vsyncpa %s436, 1
    %438 = vsyncpa [#allocation7], 1
    %s439 = scalar_lea.sflag [#allocation7], 1
    %440 = vsyncpa %s439, 1
    %441 = vsyncpa [#allocation5], 1
    %s442 = scalar_lea.sflag [#allocation5], 1
    %443 = vsyncpa %s442, 1

</llo_original>
